<compile_context>
chip_gen: v7x
topology: tpu7x:2x2x1
jax: 0.10.0
libtpu: 0.0.40
codegen_flags: <defaults>
</compile_context>

<pallas_src>
import jax
import jax.numpy as jnp
from jax import lax
from jax.experimental import pallas as pl
from jax.experimental.pallas import tpu as pltpu


def _make_masked_colsum_kernel(n, tn, needs_mask):
    """Grid = (H-tiles [parallel], N-tiles [arbitrary / reduction])."""

    def kernel(lab_ref, enc_ref, out_ref):
        i = pl.program_id(1)  # N-tile index (reduction axis, last in grid)

        @pl.when(i == 0)
        def _():
            out_ref[...] = jnp.zeros_like(out_ref)

        lab = lab_ref[...].astype(jnp.float32)   # (1, tn)   lane-dense labels
        enc = enc_ref[...].astype(jnp.float32)   # (tn, th)  encoder slab

        if needs_mask:
            # Last N-tile reads past the array; padding rows are uninitialized
            # VMEM (possibly NaN/Inf) -> zero BOTH operands for invalid rows.
            base = i * tn
            lab_ids = base + lax.broadcasted_iota(jnp.int32, (1, tn), 1)
            lab = jnp.where(lab_ids < n, lab, 0.0)
            enc_ids = base + lax.broadcasted_iota(jnp.int32, (tn, 1), 0)
            enc = jnp.where(enc_ids < n, enc, 0.0)

        # (1, tn) x (tn, th): the N-reduction runs on the MXU; accumulate
        # straight into the resident output block (no scratch, no XLU reduce).
        out_ref[...] += jnp.dot(
            lab, enc,
            preferred_element_type=jnp.float32,
            precision=lax.Precision.HIGHEST,
        )

    return kernel


def _choose_tiles(n, h, itemsize, target_tile_bytes):
    """Pick (tn, th) from a byte budget; 128-aligned; legal for any dtype."""
    # Column (lane) tiling: split H into two 128-aligned slabs when it is big
    # enough.  The "parallel" grid axis then shards the slabs across the two
    # v7x TensorCores; on 1-TC chips it is just a cheap outer loop.
    if h >= 512 and h % 256 == 0:
        th = h // 2
    else:
        th = h

    # Row tiling from a per-buffer byte budget, aligned to 128 so the
    # lane-dense (1, tn) label block is legal and the (tn, th) encoder block
    # satisfies f32/bf16/int8 sublane packing.
    rows = max(1, target_tile_bytes // max(1, th * itemsize))
    tn = max(128, (rows // 128) * 128)
    if tn >= n:
        tn = n  # single N-tile: full-extent block, no masking needed
    return tn, th


def attention_with_filter(encoder_outputs, labels,
                          w1=None, b1=None, w2=None, b2=None,
                          *, target_tile_bytes=4 << 20):
    """encoder_outputs: (N, H), labels: (N,) -> (outputs (H,), weights (N, 1)).

    w1/b1/w2/b2 are accepted for API parity with the PyTorch module but are
    provably irrelevant to the forward outputs (softmax over a size-1 axis).
    """
    n, h = encoder_outputs.shape
    out_dtype = jnp.promote_types(encoder_outputs.dtype, labels.dtype)

    # Lane-dense labels, kept in their native dtype (no wrapper-side cast).
    lab_row = labels.reshape(1, n)

    itemsize = jnp.dtype(encoder_outputs.dtype).itemsize
    tn, th = _choose_tiles(n, h, itemsize, target_tile_bytes)
    grid_n = pl.cdiv(n, tn)
    grid_h = h // th
    needs_mask = (grid_n * tn) != n

    out = pl.pallas_call(
        _make_masked_colsum_kernel(n, tn, needs_mask),
        out_shape=jax.ShapeDtypeStruct((1, h), jnp.float32),
        grid=(grid_h, grid_n),
        in_specs=[
            pl.BlockSpec((1, tn), lambda j, i: (0, i)),    # labels (lane-dense)
            pl.BlockSpec((tn, th), lambda j, i: (i, j)),   # encoder slab
        ],
        # Output block constant across the reduction axis -> resident accumulator.
        out_specs=pl.BlockSpec((1, th), lambda j, i: (0, j)),
        compiler_params=pltpu.CompilerParams(
            dimension_semantics=("parallel", "arbitrary"),
            vmem_limit_bytes=48 << 20,
        ),
    )(lab_row, encoder_outputs)

    outputs = out.reshape(h).astype(out_dtype)
    # softmax over a size-1 axis is exactly 1.0 -> weights == 1 (exact identity).
    weights = jnp.ones((n, 1), dtype=out_dtype)
    return outputs, weights


def _reference(encoder_outputs, labels, w1, b1, w2, b2):
    """Faithful JAX port of the PyTorch forward (including the dead MLP)."""
    masked = encoder_outputs * labels[:, None]
    hdn = jnp.maximum(masked @ w1 + b1, 0.0)
    energy = hdn @ w2 + b2
    weights = jax.nn.softmax(energy, axis=1)
    outputs = (masked * weights).sum(axis=0)
    return outputs, weights


if __name__ == "__main__":
    # --- small shapes matching the module (seq N=8, hidden_dim H=32) ---
    N, H = 8, 32
    key = jax.random.PRNGKey(0)
    k_enc, k_lab, k_w1, k_b1, k_w2, k_b2 = jax.random.split(key, 6)

    encoder_outputs = jax.random.normal(k_enc, (N, H), dtype=jnp.float32)
    labels = jax.random.bernoulli(k_lab, 0.7, (N,)).astype(jnp.float32)

    w1 = jax.random.normal(k_w1, (H, H // 2), dtype=jnp.float32) * 0.1
    b1 = jax.random.normal(k_b1, (1, H // 2), dtype=jnp.float32) * 0.1
    w2 = jax.random.normal(k_w2, (H // 2, 1), dtype=jnp.float32) * 0.1
    b2 = jax.random.normal(k_b2, (1, 1), dtype=jnp.float32) * 0.1

    outputs, weights = attention_with_filter(encoder_outputs, labels, w1, b1, w2, b2)
    jax.block_until_ready((outputs, weights))

    ref_out, ref_w = _reference(encoder_outputs, labels, w1, b1, w2, b2)
    assert outputs.shape == (H,) and weights.shape == (N, 1)
    assert jnp.allclose(outputs, ref_out, atol=1e-5, rtol=1e-5)
    assert jnp.allclose(weights, ref_w, atol=1e-6, rtol=1e-6)

    # --- tiled path: ragged N (in-kernel masking), N-tiling, H split in 2 ---
    N2, H2 = 1000, 512
    k1, k2 = jax.random.split(jax.random.PRNGKey(0), 2)
    enc2 = jax.random.normal(k1, (N2, H2), dtype=jnp.float32)
    lab2 = jax.random.bernoulli(k2, 0.5, (N2,)).astype(jnp.float32)
    ref2 = (enc2 * lab2[:, None]).sum(axis=0)

    # Small byte budget forces tn=128 -> 8 N-tiles with a ragged (masked) last tile.
    out2, wts2 = attention_with_filter(enc2, lab2, target_tile_bytes=128 * 256 * 4)
    jax.block_until_ready((out2, wts2))
    assert out2.shape == (H2,) and wts2.shape == (N2, 1)
    assert jnp.allclose(out2, ref2, atol=1e-3, rtol=1e-4)
    assert bool(jnp.all(wts2 == 1.0))

    # Default byte budget: single N-tile (no masking), 2 parallel H slabs.
    out3, _ = attention_with_filter(enc2, lab2)
    jax.block_until_ready(out3)
    assert jnp.allclose(out3, ref2, atol=1e-3, rtol=1e-4)

    print("KERNEL_OK")
</pallas_src>

<mosaic_0001>
module attributes {stable_mosaic.version = 11 : i64} {
  func.func @kernel(%arg0: i32, %arg1: i32, %arg2: memref<1x8xf32, #tpu.memory_space<vmem>>, %arg3: memref<8x32xf32, #tpu.memory_space<vmem>>, %arg4: memref<1x32xf32, #tpu.memory_space<vmem>>) attributes {dimension_semantics = [#tpu.dimension_semantics<parallel>, #tpu.dimension_semantics<arbitrary>], iteration_bounds = array<i64: 1, 1>, scalar_prefetch = 0 : i64, scratch_operands = 0 : i64, tpu.core_type = #tpu.core_type<tc>, window_params = [{transform_indices = @transform_0, window_bounds = array<i64: 1, 8>}, {transform_indices = @transform_1, window_bounds = array<i64: 8, 32>}, {transform_indices = @transform_2, window_bounds = array<i64: 1, 32>}]} {
    %c0_i32 = arith.constant 0 : i32
    %0 = arith.cmpi eq, %arg1, %c0_i32 : i32
    %1 = arith.extui %0 : i1 to i32
    %c0_i32_0 = arith.constant 0 : i32
    %2 = arith.cmpi ne, %1, %c0_i32_0 : i32
    scf.if %2 {
      %cst_8 = arith.constant 0.000000e+00 : f32
      %9 = vector.broadcast %cst_8 : f32 to vector<1x32xf32>
      %c0_9 = arith.constant 0 : index
      %c0_10 = arith.constant 0 : index
      %10 = vector.load %arg4[%c0_9, %c0_10] : memref<1x32xf32, #tpu.memory_space<vmem>>, vector<1x32xf32>
      tpu.vector_store %arg4[%c0_9, %c0_10], %9 {strides = array<i32>} : memref<1x32xf32, #tpu.memory_space<vmem>>, vector<1x32xf32>,
    } else {
    }
    %c0 = arith.constant 0 : index
    %c0_1 = arith.constant 0 : index
    %3 = vector.load %arg2[%c0, %c0_1] : memref<1x8xf32, #tpu.memory_space<vmem>>, vector<1x8xf32>
    %c0_2 = arith.constant 0 : index
    %c0_3 = arith.constant 0 : index
    %4 = vector.load %arg3[%c0_2, %c0_3] : memref<8x32xf32, #tpu.memory_space<vmem>>, vector<8x32xf32>
    %c0_4 = arith.constant 0 : index
    %c0_5 = arith.constant 0 : index
    %5 = vector.load %arg4[%c0_4, %c0_5] : memref<1x32xf32, #tpu.memory_space<vmem>>, vector<1x32xf32>
    %cst = arith.constant dense<0.000000e+00> : vector<1x32xf32>
    %6 = tpu.matmul %3, %4, %cst {dimension_numbers = #tpu.dot_dimension_numbers<[1], [0], [0], [1], [0, 0, 1, 1], [], []>, precision = #tpu.contract_precision<fp32>} : vector<1x8xf32>, vector<8x32xf32>, vector<1x32xf32> -> vector<1x32xf32>
    %7 = arith.addf %5, %6 : vector<1x32xf32>
    %c0_6 = arith.constant 0 : index
    %c0_7 = arith.constant 0 : index
    %8 = vector.load %arg4[%c0_6, %c0_7] : memref<1x32xf32, #tpu.memory_space<vmem>>, vector<1x32xf32>
    tpu.vector_store %arg4[%c0_6, %c0_7], %7 {strides = array<i32>} : memref<1x32xf32, #tpu.memory_space<vmem>>, vector<1x32xf32>,
    return
  }
  func.func @transform_0(%arg0: i32, %arg1: i32) -> (i32, i32) {
    %c0_i32 = arith.constant 0 : i32
    %c0_i32_0 = arith.constant 0 : i32
    return %c0_i32, %arg1 : i32, i32
  }
  func.func @transform_1(%arg0: i32, %arg1: i32) -> (i32, i32) {
    %c0_i32 = arith.constant 0 : i32
    return %arg1, %arg0 : i32, i32
  }
  func.func @transform_2(%arg0: i32, %arg1: i32) -> (i32, i32) {
    %c0_i32 = arith.constant 0 : i32
    %c0_i32_0 = arith.constant 0 : i32
    return %c0_i32, %arg0 : i32, i32
  }
}

</mosaic_0001>

<llo_original>
// kernel: tpu_custom_call.1
$region0: #{tpu_custom_call.1}
  #allocation0 [shape = 'u32[]', space=smem, size = 0x4, offset = 0x4, fixed_abs, tag = 'smem constant byte address 0x4 - core index']
  #allocation1 [shape = 'u32[144,128]{1,0:T(1,128)}', space=vmem, size = 0x12000, scoped, tag = 'internal scratch']
  %s0 = inlined_call_operand.hbm [shape: f32[1,8], index: 0, kind: input, shape index: {}]
  %s1 = inlined_call_operand.hbm [shape: f32[8,32], index: 1, kind: input, shape index: {}]
  %s2 = inlined_call_operand.hbm [shape: f32[1,32], index: 2, kind: output, shape index: {}]
  %s3 = sld [smem:[#allocation0]]
  $region30: #{tpu_custom_call.1} parent=0
    _
  %s5 = ssub.s32 1, %s3
  %s6 = scalar_select 0, %s5, %s3
  $region1: #{tpu_custom_call.1} parent=0
    #allocation2 [shape = 'u8[512]{0}', space=vmem, size = 0x400, scoped, tag = 'input window, operand 0, single buffered']
    #allocation3 [shape = 's32[1]{0}', space=sflag, size = 0x4, scoped, tag = 'scoped memory for tpu_custom_call.1']
    #allocation4 [shape = 's32[1]{0}', space=sflag, size = 0x4, scoped, tag = 'scoped memory for tpu_custom_call.1']
    #allocation5 [shape = 'u8[4096]{0}', space=vmem, size = 0x1000, scoped, tag = 'input window, operand 1, single buffered']
    #allocation6 [shape = 's32[1]{0}', space=sflag, size = 0x4, scoped, tag = 'scoped memory for tpu_custom_call.1']
    #allocation7 [shape = 'u8[512]{0}', space=vmem, size = 0x400, scoped, tag = 'output window, operand 0, single buffered']
    %7 = vsyncpa [#allocation3], 0
    %8 = vsyncpa [#allocation6], 0
    %9 = vsyncpa [#allocation4], 0
    // Predicated region
    $region2: #{tpu_custom_call.1} parent=1 // pred_check
      _
    $region3: #{tpu_custom_call.1} parent=1 // pred_check_branch
      %11 = sbr.rel (0) target = $region5
    $region4: #{tpu_custom_call.1} parent=1 // pred_region
      %s13 = ssub.s32 16, 16
      %14 = vsyncadd [#allocation3], %s13
      %s16 = sshll.u32 [#allocation2], 4
      %s17 = int_to_ptr.vmem [resolvable:$true] %s16
      %19 = dma.hbm_to_vmem [thread:$0]  %s0, 16, %s17, [#allocation3]
    $region5: #{tpu_custom_call.1} parent=1 // pred_fallthru
      _
    // Predicated region
    $region6: #{tpu_custom_call.1} parent=1 // pred_check
      _
    $region7: #{tpu_custom_call.1} parent=1 // pred_check_branch
      %21 = sbr.rel (0) target = $region9
    $region8: #{tpu_custom_call.1} parent=1 // pred_region
      %s23 = ssub.s32 128, 128
      %24 = vsyncadd [#allocation6], %s23
      %s26 = sshll.u32 [#allocation5], 4
      %s27 = int_to_ptr.vmem [resolvable:$true] %s26
      %29 = dma.hbm_to_vmem [thread:$0]  %s1, 128, %s27, [#allocation6]
    $region9: #{tpu_custom_call.1} parent=1 // pred_fallthru
      _
    // Predicated region
    $region10: #{tpu_custom_call.1} parent=1 // pred_check
      _
    $region11: #{tpu_custom_call.1} parent=1 // pred_check_branch
      %31 = sbr.rel (0) target = $region13
    $region12: #{tpu_custom_call.1} parent=1 // pred_region
      %32 = dma.done [#allocation3], 16
    $region13: #{tpu_custom_call.1} parent=1 // pred_fallthru
      _
    // Predicated region
    $region14: #{tpu_custom_call.1} parent=1 // pred_check
      _
    $region15: #{tpu_custom_call.1} parent=1 // pred_check_branch
      %34 = sbr.rel (0) target = $region17
    $region16: #{tpu_custom_call.1} parent=1 // pred_region
      %35 = dma.done [#allocation6], 128
    $region17: #{tpu_custom_call.1} parent=1 // pred_fallthru
      _
    %p36 = scmp.eq.s32.totalorder 0, 0
    // Predicated region
    $region18: #{tpu_custom_call.1} parent=1 // pred_check
      %p37 = pneg %p36
    $region19: #{tpu_custom_call.1} parent=1 // pred_check_branch
      %39 = sbr.rel (%p37) target = $region21
    $region20: #{tpu_custom_call.1} parent=1 // pred_region
      %vm40 = vcmask 253952
      %41 = vst.msk [vmem:[#allocation7] sm:$0x1] %vm40, 0.0
    $region21: #{tpu_custom_call.1} parent=1 // pred_fallthru
      _
    %v42 = vld [vmem:[#allocation2] sm:$0x1]
    %v43 = vld [vmem:[#allocation5] sm:$0xff]
    %v44 = vld [vmem:[#allocation7] sm:$0x1]
    %vm45 = vcmask 64512
    %v47 = vsel %vm45, %v42, 0
    %49 = vmatprep.subr.mxu0 0.0
    %v50 = vand.u32 %v43, 4294901760
    %51 = vmatpush1.msra.mxu0 %v50
    %52 = vmatprep.subr.mxu0 0.0
    %53 = vmatpush1.msra.mxu0 0.0
    %54 = vmatprep.subr.mxu0 0.0
    %55 = vmatpush1.msra.mxu0 0.0
    %56 = vmatprep.subr.mxu0 0.0
    %57 = vmatpush1.msra.mxu0 0.0
    %58 = vmatprep.subr.mxu0 0.0
    %59 = vmatpush1.msra.mxu0 0.0
    %60 = vmatprep.subr.mxu0 0.0
    %61 = vmatpush1.msra.mxu0 0.0
    %62 = vmatprep.subr.mxu0 0.0
    %63 = vmatpush1.msra.mxu0 0.0
    %64 = vmatprep.subr.mxu0 0.0
    %65 = vmatpush1.msra.mxu0 0.0
    %66 = vmatprep.subr.mxu0 0.0
    %67 = vmatpush1.msra.mxu0 0.0
    %68 = vmatprep.subr.mxu0 0.0
    %69 = vmatpush1.msra.mxu0 0.0
    %70 = vmatprep.subr.mxu0 0.0
    %71 = vmatpush1.msra.mxu0 0.0
    %72 = vmatprep.subr.mxu0 0.0
    %73 = vmatpush1.msra.mxu0 0.0
    %74 = vmatprep.subr.mxu0 0.0
    %75 = vmatpush1.msra.mxu0 0.0
    %76 = vmatprep.subr.mxu0 0.0
    %77 = vmatpush1.msra.mxu0 0.0
    %78 = vmatprep.subr.mxu0 0.0
    %79 = vmatpush1.msra.mxu0 0.0
    %80 = vmatprep.subr.mxu0 0.0
    %81 = vmatpush1.msra.mxu0 0.0
    %82 = vmatprep.subr.mxu0 0.0
    %83 = vmatpush1.msra.mxu0 0.0
    %84 = vmatprep.subr.mxu0 0.0
    %85 = vmatpush1.msra.mxu0 0.0
    %86 = vmatprep.subr.mxu0 0.0
    %87 = vmatpush1.msra.mxu0 0.0
    %88 = vmatprep.subr.mxu0 0.0
    %89 = vmatpush1.msra.mxu0 0.0
    %90 = vmatprep.subr.mxu0 0.0
    %91 = vmatpush1.msra.mxu0 0.0
    %92 = vmatprep.subr.mxu0 0.0
    %93 = vmatpush1.msra.mxu0 0.0
    %94 = vmatprep.subr.mxu0 0.0
    %95 = vmatpush1.msra.mxu0 0.0
    %96 = vmatprep.subr.mxu0 0.0
    %97 = vmatpush1.msra.mxu0 0.0
    %98 = vmatprep.subr.mxu0 0.0
    %99 = vmatpush1.msra.mxu0 0.0
    %100 = vmatprep.subr.mxu0 0.0
    %101 = vmatpush1.msra.mxu0 0.0
    %102 = vmatprep.subr.mxu0 0.0
    %103 = vmatpush1.msra.mxu0 0.0
    %104 = vmatprep.subr.mxu0 0.0
    %105 = vmatpush1.msra.mxu0 0.0
    %106 = vmatprep.subr.mxu0 0.0
    %107 = vmatpush1.msra.mxu0 0.0
    %108 = vmatprep.subr.mxu0 0.0
    %109 = vmatpush1.msra.mxu0 0.0
    %110 = vmatprep.subr.mxu0 0.0
    %111 = vmatpush1.msra.mxu0 0.0
    %112 = vmatprep.subr.mxu0 0.0
    %113 = vmatpush1.msra.mxu0 0.0
    %114 = vmatprep.mubr.f32.mxu0 0.0
    %v115 = vand.u32 %v47, 4294901760
    %v116 = vsub.f32 %v47, %v115
    %v117 = vand.u32 %v116, 4294901760
    %v118 = vsub.f32 %v116, %v117
    %v119 = vand.u32 %v118, 4294901760
    %120 = vmatmul.mubr.f32.gmra.mrb[0].mxu0 %v119
    %v121 = vpop.f32.mrb[0].mxu0
    %v122 = vadd.f32 0.0, %v121
    %v123 = vpop.f32.mrb[0].mxu0
    %124 = vdwg.mxu0
    %125 = vmatprep.subr.mxu0 0.0
    %v126 = vand.u32 %v43, 4294901760
    %v127 = vsub.f32 %v43, %v126
    %v128 = vand.u32 %v127, 4294901760
    %v129 = vsub.f32 %v127, %v128
    %v130 = vand.u32 %v129, 4294901760
    %131 = vmatpush1.msra.mxu0 %v130
    %132 = vmatprep.subr.mxu0 0.0
    %133 = vmatpush1.msra.mxu0 0.0
    %134 = vmatprep.subr.mxu0 0.0
    %135 = vmatpush1.msra.mxu0 0.0
    %136 = vmatprep.subr.mxu0 0.0
    %137 = vmatpush1.msra.mxu0 0.0
    %138 = vmatprep.subr.mxu0 0.0
    %139 = vmatpush1.msra.mxu0 0.0
    %140 = vmatprep.subr.mxu0 0.0
    %141 = vmatpush1.msra.mxu0 0.0
    %142 = vmatprep.subr.mxu0 0.0
    %143 = vmatpush1.msra.mxu0 0.0
    %144 = vmatprep.subr.mxu0 0.0
    %145 = vmatpush1.msra.mxu0 0.0
    %146 = vmatprep.subr.mxu0 0.0
    %147 = vmatpush1.msra.mxu0 0.0
    %148 = vmatprep.subr.mxu0 0.0
    %149 = vmatpush1.msra.mxu0 0.0
    %150 = vmatprep.subr.mxu0 0.0
    %151 = vmatpush1.msra.mxu0 0.0
    %152 = vmatprep.subr.mxu0 0.0
    %153 = vmatpush1.msra.mxu0 0.0
    %154 = vmatprep.subr.mxu0 0.0
    %155 = vmatpush1.msra.mxu0 0.0
    %156 = vmatprep.subr.mxu0 0.0
    %157 = vmatpush1.msra.mxu0 0.0
    %158 = vmatprep.subr.mxu0 0.0
    %159 = vmatpush1.msra.mxu0 0.0
    %160 = vmatprep.subr.mxu0 0.0
    %161 = vmatpush1.msra.mxu0 0.0
    %162 = vmatprep.subr.mxu0 0.0
    %163 = vmatpush1.msra.mxu0 0.0
    %164 = vmatprep.subr.mxu0 0.0
    %165 = vmatpush1.msra.mxu0 0.0
    %166 = vmatprep.subr.mxu0 0.0
    %167 = vmatpush1.msra.mxu0 0.0
    %168 = vmatprep.subr.mxu0 0.0
    %169 = vmatpush1.msra.mxu0 0.0
    %170 = vmatprep.subr.mxu0 0.0
    %171 = vmatpush1.msra.mxu0 0.0
    %172 = vmatprep.subr.mxu0 0.0
    %173 = vmatpush1.msra.mxu0 0.0
    %174 = vmatprep.subr.mxu0 0.0
    %175 = vmatpush1.msra.mxu0 0.0
    %176 = vmatprep.subr.mxu0 0.0
    %177 = vmatpush1.msra.mxu0 0.0
    %178 = vmatprep.subr.mxu0 0.0
    %179 = vmatpush1.msra.mxu0 0.0
    %180 = vmatprep.subr.mxu0 0.0
    %181 = vmatpush1.msra.mxu0 0.0
    %182 = vmatprep.subr.mxu0 0.0
    %183 = vmatpush1.msra.mxu0 0.0
    %184 = vmatprep.subr.mxu0 0.0
    %185 = vmatpush1.msra.mxu0 0.0
    %186 = vmatprep.subr.mxu0 0.0
    %187 = vmatpush1.msra.mxu0 0.0
    %188 = vmatprep.subr.mxu0 0.0
    %189 = vmatpush1.msra.mxu0 0.0
    %190 = vmatprep.subr.mxu0 0.0
    %191 = vmatpush1.msra.mxu0 0.0
    %192 = vmatprep.subr.mxu0 0.0
    %193 = vmatpush1.msra.mxu0 0.0
    %194 = vmatprep.mubr.f32.mxu0 0.0
    %v195 = vand.u32 %v47, 4294901760
    %196 = vmatmul.mubr.f32.gmra.mrb[0].mxu0 %v195
    %v197 = vpop.f32.mrb[0].mxu0
    %v198 = vadd.f32 %v122, %v197
    %v199 = vpop.f32.mrb[0].mxu0
    %200 = vdwg.mxu0
    %201 = vmatprep.subr.mxu0 0.0
    %v202 = vand.u32 %v43, 4294901760
    %v203 = vsub.f32 %v43, %v202
    %204 = vmatpush1.msra.mxu0 %v203
    %205 = vmatprep.subr.mxu0 0.0
    %206 = vmatpush1.msra.mxu0 0.0
    %207 = vmatprep.subr.mxu0 0.0
    %208 = vmatpush1.msra.mxu0 0.0
    %209 = vmatprep.subr.mxu0 0.0
    %210 = vmatpush1.msra.mxu0 0.0
    %211 = vmatprep.subr.mxu0 0.0
    %212 = vmatpush1.msra.mxu0 0.0
    %213 = vmatprep.subr.mxu0 0.0
    %214 = vmatpush1.msra.mxu0 0.0
    %215 = vmatprep.subr.mxu0 0.0
    %216 = vmatpush1.msra.mxu0 0.0
    %217 = vmatprep.subr.mxu0 0.0
    %218 = vmatpush1.msra.mxu0 0.0
    %219 = vmatprep.subr.mxu0 0.0
    %220 = vmatpush1.msra.mxu0 0.0
    %221 = vmatprep.subr.mxu0 0.0
    %222 = vmatpush1.msra.mxu0 0.0
    %223 = vmatprep.subr.mxu0 0.0
    %224 = vmatpush1.msra.mxu0 0.0
    %225 = vmatprep.subr.mxu0 0.0
    %226 = vmatpush1.msra.mxu0 0.0
    %227 = vmatprep.subr.mxu0 0.0
    %228 = vmatpush1.msra.mxu0 0.0
    %229 = vmatprep.subr.mxu0 0.0
    %230 = vmatpush1.msra.mxu0 0.0
    %231 = vmatprep.subr.mxu0 0.0
    %232 = vmatpush1.msra.mxu0 0.0
    %233 = vmatprep.subr.mxu0 0.0
    %234 = vmatpush1.msra.mxu0 0.0
    %235 = vmatprep.subr.mxu0 0.0
    %236 = vmatpush1.msra.mxu0 0.0
    %237 = vmatprep.subr.mxu0 0.0
    %238 = vmatpush1.msra.mxu0 0.0
    %239 = vmatprep.subr.mxu0 0.0
    %240 = vmatpush1.msra.mxu0 0.0
    %241 = vmatprep.subr.mxu0 0.0
    %242 = vmatpush1.msra.mxu0 0.0
    %243 = vmatprep.subr.mxu0 0.0
    %244 = vmatpush1.msra.mxu0 0.0
    %245 = vmatprep.subr.mxu0 0.0
    %246 = vmatpush1.msra.mxu0 0.0
    %247 = vmatprep.subr.mxu0 0.0
    %248 = vmatpush1.msra.mxu0 0.0
    %249 = vmatprep.subr.mxu0 0.0
    %250 = vmatpush1.msra.mxu0 0.0
    %251 = vmatprep.subr.mxu0 0.0
    %252 = vmatpush1.msra.mxu0 0.0
    %253 = vmatprep.subr.mxu0 0.0
    %254 = vmatpush1.msra.mxu0 0.0
    %255 = vmatprep.subr.mxu0 0.0
    %256 = vmatpush1.msra.mxu0 0.0
    %257 = vmatprep.subr.mxu0 0.0
    %258 = vmatpush1.msra.mxu0 0.0
    %259 = vmatprep.subr.mxu0 0.0
    %260 = vmatpush1.msra.mxu0 0.0
    %261 = vmatprep.subr.mxu0 0.0
    %262 = vmatpush1.msra.mxu0 0.0
    %263 = vmatprep.subr.mxu0 0.0
    %264 = vmatpush1.msra.mxu0 0.0
    %265 = vmatprep.subr.mxu0 0.0
    %266 = vmatpush1.msra.mxu0 0.0
    %267 = vmatprep.mubr.f32.mxu0 0.0
    %v268 = vand.u32 %v47, 4294901760
    %v269 = vsub.f32 %v47, %v268
    %270 = vmatmul.mubr.f32.gmra.mrb[0].mxu0 %v269
    %v271 = vpop.f32.mrb[0].mxu0
    %v272 = vadd.f32 %v198, %v271
    %v273 = vpop.f32.mrb[0].mxu0
    %274 = vdwg.mxu0
    %275 = vmatprep.subr.mxu0 0.0
    %v276 = vand.u32 %v43, 4294901760
    %277 = vmatpush1.msra.mxu0 %v276
    %278 = vmatprep.subr.mxu0 0.0
    %279 = vmatpush1.msra.mxu0 0.0
    %280 = vmatprep.subr.mxu0 0.0
    %281 = vmatpush1.msra.mxu0 0.0
    %282 = vmatprep.subr.mxu0 0.0
    %283 = vmatpush1.msra.mxu0 0.0
    %284 = vmatprep.subr.mxu0 0.0
    %285 = vmatpush1.msra.mxu0 0.0
    %286 = vmatprep.subr.mxu0 0.0
    %287 = vmatpush1.msra.mxu0 0.0
    %288 = vmatprep.subr.mxu0 0.0
    %289 = vmatpush1.msra.mxu0 0.0
    %290 = vmatprep.subr.mxu0 0.0
    %291 = vmatpush1.msra.mxu0 0.0
    %292 = vmatprep.subr.mxu0 0.0
    %293 = vmatpush1.msra.mxu0 0.0
    %294 = vmatprep.subr.mxu0 0.0
    %295 = vmatpush1.msra.mxu0 0.0
    %296 = vmatprep.subr.mxu0 0.0
    %297 = vmatpush1.msra.mxu0 0.0
    %298 = vmatprep.subr.mxu0 0.0
    %299 = vmatpush1.msra.mxu0 0.0
    %300 = vmatprep.subr.mxu0 0.0
    %301 = vmatpush1.msra.mxu0 0.0
    %302 = vmatprep.subr.mxu0 0.0
    %303 = vmatpush1.msra.mxu0 0.0
    %304 = vmatprep.subr.mxu0 0.0
    %305 = vmatpush1.msra.mxu0 0.0
    %306 = vmatprep.subr.mxu0 0.0
    %307 = vmatpush1.msra.mxu0 0.0
    %308 = vmatprep.subr.mxu0 0.0
    %309 = vmatpush1.msra.mxu0 0.0
    %310 = vmatprep.subr.mxu0 0.0
    %311 = vmatpush1.msra.mxu0 0.0
    %312 = vmatprep.subr.mxu0 0.0
    %313 = vmatpush1.msra.mxu0 0.0
    %314 = vmatprep.subr.mxu0 0.0
    %315 = vmatpush1.msra.mxu0 0.0
    %316 = vmatprep.subr.mxu0 0.0
    %317 = vmatpush1.msra.mxu0 0.0
    %318 = vmatprep.subr.mxu0 0.0
    %319 = vmatpush1.msra.mxu0 0.0
    %320 = vmatprep.subr.mxu0 0.0
    %321 = vmatpush1.msra.mxu0 0.0
    %322 = vmatprep.subr.mxu0 0.0
    %323 = vmatpush1.msra.mxu0 0.0
    %324 = vmatprep.subr.mxu0 0.0
    %325 = vmatpush1.msra.mxu0 0.0
    %326 = vmatprep.subr.mxu0 0.0
    %327 = vmatpush1.msra.mxu0 0.0
    %328 = vmatprep.subr.mxu0 0.0
    %329 = vmatpush1.msra.mxu0 0.0
    %330 = vmatprep.subr.mxu0 0.0
    %331 = vmatpush1.msra.mxu0 0.0
    %332 = vmatprep.subr.mxu0 0.0
    %333 = vmatpush1.msra.mxu0 0.0
    %334 = vmatprep.subr.mxu0 0.0
    %335 = vmatpush1.msra.mxu0 0.0
    %336 = vmatprep.subr.mxu0 0.0
    %337 = vmatpush1.msra.mxu0 0.0
    %338 = vmatprep.subr.mxu0 0.0
    %339 = vmatpush1.msra.mxu0 0.0
    %340 = vmatprep.mubr.f32.mxu0 0.0
    %v341 = vand.u32 %v47, 4294901760
    %v342 = vsub.f32 %v47, %v341
    %v343 = vand.u32 %v342, 4294901760
    %344 = vmatmul.mubr.f32.gmra.mrb[0].mxu0 %v343
    %v345 = vpop.f32.mrb[0].mxu0
    %v346 = vadd.f32 %v272, %v345
    %v347 = vpop.f32.mrb[0].mxu0
    %348 = vdwg.mxu0
    %349 = vmatprep.subr.mxu0 0.0
    %v350 = vand.u32 %v43, 4294901760
    %v351 = vsub.f32 %v43, %v350
    %v352 = vand.u32 %v351, 4294901760
    %353 = vmatpush1.msra.mxu0 %v352
    %354 = vmatprep.subr.mxu0 0.0
    %355 = vmatpush1.msra.mxu0 0.0
    %356 = vmatprep.subr.mxu0 0.0
    %357 = vmatpush1.msra.mxu0 0.0
    %358 = vmatprep.subr.mxu0 0.0
    %359 = vmatpush1.msra.mxu0 0.0
    %360 = vmatprep.subr.mxu0 0.0
    %361 = vmatpush1.msra.mxu0 0.0
    %362 = vmatprep.subr.mxu0 0.0
    %363 = vmatpush1.msra.mxu0 0.0
    %364 = vmatprep.subr.mxu0 0.0
    %365 = vmatpush1.msra.mxu0 0.0
    %366 = vmatprep.subr.mxu0 0.0
    %367 = vmatpush1.msra.mxu0 0.0
    %368 = vmatprep.subr.mxu0 0.0
    %369 = vmatpush1.msra.mxu0 0.0
    %370 = vmatprep.subr.mxu0 0.0
    %371 = vmatpush1.msra.mxu0 0.0
    %372 = vmatprep.subr.mxu0 0.0
    %373 = vmatpush1.msra.mxu0 0.0
    %374 = vmatprep.subr.mxu0 0.0
    %375 = vmatpush1.msra.mxu0 0.0
    %376 = vmatprep.subr.mxu0 0.0
    %377 = vmatpush1.msra.mxu0 0.0
    %378 = vmatprep.subr.mxu0 0.0
    %379 = vmatpush1.msra.mxu0 0.0
    %380 = vmatprep.subr.mxu0 0.0
    %381 = vmatpush1.msra.mxu0 0.0
    %382 = vmatprep.subr.mxu0 0.0
    %383 = vmatpush1.msra.mxu0 0.0
    %384 = vmatprep.subr.mxu0 0.0
    %385 = vmatpush1.msra.mxu0 0.0
    %386 = vmatprep.subr.mxu0 0.0
    %387 = vmatpush1.msra.mxu0 0.0
    %388 = vmatprep.subr.mxu0 0.0
    %389 = vmatpush1.msra.mxu0 0.0
    %390 = vmatprep.subr.mxu0 0.0
    %391 = vmatpush1.msra.mxu0 0.0
    %392 = vmatprep.subr.mxu0 0.0
    %393 = vmatpush1.msra.mxu0 0.0
    %394 = vmatprep.subr.mxu0 0.0
    %395 = vmatpush1.msra.mxu0 0.0
    %396 = vmatprep.subr.mxu0 0.0
    %397 = vmatpush1.msra.mxu0 0.0
    %398 = vmatprep.subr.mxu0 0.0
    %399 = vmatpush1.msra.mxu0 0.0
    %400 = vmatprep.subr.mxu0 0.0
    %401 = vmatpush1.msra.mxu0 0.0
    %402 = vmatprep.subr.mxu0 0.0
    %403 = vmatpush1.msra.mxu0 0.0
    %404 = vmatprep.subr.mxu0 0.0
    %405 = vmatpush1.msra.mxu0 0.0
    %406 = vmatprep.subr.mxu0 0.0
    %407 = vmatpush1.msra.mxu0 0.0
    %408 = vmatprep.subr.mxu0 0.0
    %409 = vmatpush1.msra.mxu0 0.0
    %410 = vmatprep.subr.mxu0 0.0
    %411 = vmatpush1.msra.mxu0 0.0
    %412 = vmatprep.subr.mxu0 0.0
    %413 = vmatpush1.msra.mxu0 0.0
    %414 = vmatprep.subr.mxu0 0.0
    %415 = vmatpush1.msra.mxu0 0.0
    %416 = vmatprep.mubr.f32.mxu0 0.0
    %v417 = vand.u32 %v47, 4294901760
    %418 = vmatmul.mubr.f32.gmra.mrb[0].mxu0 %v417
    %v419 = vpop.f32.mrb[0].mxu0
    %v420 = vadd.f32 %v346, %v419
    %v421 = vpop.f32.mrb[0].mxu0
    %422 = vdwg.mxu0
    %423 = vmatprep.subr.mxu0 0.0
    %v424 = vand.u32 %v43, 4294901760
    %425 = vmatpush1.msra.mxu0 %v424
    %426 = vmatprep.subr.mxu0 0.0
    %427 = vmatpush1.msra.mxu0 0.0
    %428 = vmatprep.subr.mxu0 0.0
    %429 = vmatpush1.msra.mxu0 0.0
    %430 = vmatprep.subr.mxu0 0.0
    %431 = vmatpush1.msra.mxu0 0.0
    %432 = vmatprep.subr.mxu0 0.0
    %433 = vmatpush1.msra.mxu0 0.0
    %434 = vmatprep.subr.mxu0 0.0
    %435 = vmatpush1.msra.mxu0 0.0
    %436 = vmatprep.subr.mxu0 0.0
    %437 = vmatpush1.msra.mxu0 0.0
    %438 = vmatprep.subr.mxu0 0.0
    %439 = vmatpush1.msra.mxu0 0.0
    %440 = vmatprep.subr.mxu0 0.0
    %441 = vmatpush1.msra.mxu0 0.0
    %442 = vmatprep.subr.mxu0 0.0
    %443 = vmatpush1.msra.mxu0 0.0
    %444 = vmatprep.subr.mxu0 0.0
    %445 = vmatpush1.msra.mxu0 0.0
    %446 = vmatprep.subr.mxu0 0.0
    %447 = vmatpush1.msra.mxu0 0.0
    %448 = vmatprep.subr.mxu0 0.0
    %449 = vmatpush1.msra.mxu0 0.0
    %450 = vmatprep.subr.mxu0 0.0
    %451 = vmatpush1.msra.mxu0 0.0
    %452 = vmatprep.subr.mxu0 0.0
    %453 = vmatpush1.msra.mxu0 0.0
    %454 = vmatprep.subr.mxu0 0.0
    %455 = vmatpush1.msra.mxu0 0.0
    %456 = vmatprep.subr.mxu0 0.0
    %457 = vmatpush1.msra.mxu0 0.0
    %458 = vmatprep.subr.mxu0 0.0
    %459 = vmatpush1.msra.mxu0 0.0
    %460 = vmatprep.subr.mxu0 0.0
    %461 = vmatpush1.msra.mxu0 0.0
    %462 = vmatprep.subr.mxu0 0.0
    %463 = vmatpush1.msra.mxu0 0.0
    %464 = vmatprep.subr.mxu0 0.0
    %465 = vmatpush1.msra.mxu0 0.0
    %466 = vmatprep.subr.mxu0 0.0
    %467 = vmatpush1.msra.mxu0 0.0
    %468 = vmatprep.subr.mxu0 0.0
    %469 = vmatpush1.msra.mxu0 0.0
    %470 = vmatprep.subr.mxu0 0.0
    %471 = vmatpush1.msra.mxu0 0.0
    %472 = vmatprep.subr.mxu0 0.0
    %473 = vmatpush1.msra.mxu0 0.0
    %474 = vmatprep.subr.mxu0 0.0
    %475 = vmatpush1.msra.mxu0 0.0
    %476 = vmatprep.subr.mxu0 0.0
    %477 = vmatpush1.msra.mxu0 0.0
    %478 = vmatprep.subr.mxu0 0.0
    %479 = vmatpush1.msra.mxu0 0.0
    %480 = vmatprep.subr.mxu0 0.0
    %481 = vmatpush1.msra.mxu0 0.0
    %482 = vmatprep.subr.mxu0 0.0
    %483 = vmatpush1.msra.mxu0 0.0
    %484 = vmatprep.subr.mxu0 0.0
    %485 = vmatpush1.msra.mxu0 0.0
    %486 = vmatprep.subr.mxu0 0.0
    %487 = vmatpush1.msra.mxu0 0.0
    %488 = vmatprep.mubr.f32.mxu0 0.0
    %v489 = vand.u32 %v47, 4294901760
    %490 = vmatmul.mubr.f32.gmra.mrb[0].mxu0 %v489
    %v491 = vpop.f32.mrb[0].mxu0
    %v492 = vadd.f32 %v420, %v491
    %v493 = vpop.f32.mrb[0].mxu0
    %494 = vdwg.mxu0
    %v495 = vadd.f32 %v44, %v492
    %vm496 = vcmask 253952
    %497 = vst.msk [vmem:[#allocation7] sm:$0x1] %vm496, %v495
    // Predicated region
    $region22: #{tpu_custom_call.1} parent=1 // pred_check
      _
    $region23: #{tpu_custom_call.1} parent=1 // pred_check_branch
      %499 = sbr.rel (0) target = $region25
    $region24: #{tpu_custom_call.1} parent=1 // pred_region
      %s501 = ssub.s32 16, 16
      %502 = vsyncadd [#allocation4], %s501
      %s504 = sshll.u32 [#allocation7], 4
      %s505 = int_to_ptr.vmem [resolvable:$true] %s504
      %507 = dma.vmem_to_hbm [thread:$0]  %s505, 16, %s2, [#allocation4]
    $region25: #{tpu_custom_call.1} parent=1 // pred_fallthru
      _
    // Predicated region
    $region26: #{tpu_custom_call.1} parent=1 // pred_check
      _
    $region27: #{tpu_custom_call.1} parent=1 // pred_check_branch
      %509 = sbr.rel (0) target = $region29
    $region28: #{tpu_custom_call.1} parent=1 // pred_region
      %510 = dma.done [#allocation4], 16
    $region29: #{tpu_custom_call.1} parent=1 // pred_fallthru
      _
    %511 = vsyncpa [#allocation3], 1
    %512 = vsyncpa [#allocation6], 1
    %513 = vsyncpa [#allocation4], 1

</llo_original>
